<compile_context>
chip_gen: v7x
topology: tpu7x:2x2x1
jax: 0.10.0
libtpu: 0.0.40
codegen_flags: <defaults>
</compile_context>

<pallas_src>
import itertools
from functools import partial

import jax
import jax.numpy as jnp
import numpy as np
from jax.experimental import pallas as pl
from jax.experimental.pallas import tpu as pltpu


def _round_up(x: int, m: int) -> int:
    return ((x + m - 1) // m) * m


def _pick_edge_tile(n_edges: int, c_pad: int, bytes_per_elem: int) -> int:
    """Lane-tile (edges per grid step) for the edge kernel, C/VMEM-aware."""
    # ~2 MiB of each streamed operand per step -> amortizes per-step overhead.
    target = (2 * 1024 * 1024) // (bytes_per_elem * c_pad)
    # 2 operands x 2 pipeline buffers must fit a v7x-safe VMEM budget (~24 MiB).
    vmem_cap = (24 * 1024 * 1024) // (4 * bytes_per_elem * c_pad)
    # Keep >= ~8 grid steps when there are enough edges (v7x has 2 TensorCores).
    keep_grid = max(512, -(-max(n_edges, 1) // 8))
    te = min(target, vmem_cap, 65536, keep_grid)
    return _round_up(max(te, 128), 128)


def _edge_block_kernel(fsrc_ref, fdst_ref, out_ref, *, n_edges: int):
    """Per edge-tile sum of log(1 - exp(-d_e)) + d_e (edges on the lane axis)."""
    i = pl.program_id(0)
    fs = fsrc_ref[...].astype(jnp.float32)                  # (C_pad, TE)
    fd = fdst_ref[...].astype(jnp.float32)                  # (C_pad, TE)
    te = fs.shape[1]
    d = jnp.sum(fs * fd, axis=0, keepdims=True)             # (1, TE) per-edge dots
    col = jax.lax.broadcasted_iota(jnp.int32, (1, te), 1)
    valid = (i * te + col) < n_edges                        # mask padded tail edges
    d_safe = jnp.where(valid, d, 1.0)                       # keep tanh/log finite on pads
    # Stable form of log(1 - exp(-d)) + d via 1 - exp(-d) = 2*tanh(d/2)/(1+tanh(d/2)):
    # no catastrophic cancellation for tiny d, same NaN/-inf behaviour for d <= 0.
    t = jnp.tanh(0.5 * d_safe)
    contrib = d_safe + jnp.log(2.0 * t / (1.0 + t))
    contrib = jnp.where(valid, contrib, 0.0)
    part = jnp.sum(contrib, axis=1, keepdims=True)          # (1, 1)
    # Lane-dense (and negligible-size) per-tile partial; wrapper reads lane 0.
    out_ref[...] = jnp.broadcast_to(part, (1, 1, 128))


def graph_log_likelihood(f, edge_src, edge_dst, *, edge_dtype=jnp.bfloat16):
    """f: (n_nodes, n_comm) float; edge_src/edge_dst: (n_edges,) int with src < dst."""
    n_nodes, n_comm = f.shape
    n_edges = int(edge_src.shape[0])
    f32 = f.astype(jnp.float32)

    # ---- triangle term T = 0.5 * (||sum_i F[i]||^2 - sum_i ||F[i]||^2) ------
    # Per the perf review this stays as fused XLA reductions: they read F once
    # in its native (N, C) layout at HBM roofline, whereas the previous Pallas
    # node-reduce kernel first materialized a transposed, padded copy of F.
    s = jnp.sum(f32, axis=0)                                 # (C,) column sums
    sum_sq = jnp.sum(f32 * f32)                              # sum_i ||F[i]||^2
    tri_total = 0.5 * (jnp.dot(s, s) - sum_sq)
    # TODO(synk): for very large N do this O(C) combine in float64
    # (requires jax_enable_x64) to avoid f32 cancellation between ||s||^2 and sum_sq.

    # ---- edge term sum_e [ log(1 - exp(-d_e)) + d_e ] -----------------------
    bpe = jnp.dtype(edge_dtype).itemsize
    c_pad = _round_up(n_comm, 8 if bpe == 4 else 16)         # full sublane packing
    te = _pick_edge_tile(n_edges, c_pad, bpe)
    e_pad = _round_up(max(n_edges, 1), te)
    n_edge_tiles = e_pad // te

    # Contiguous row gather (axis=0) of a narrow copy of F, then one transpose
    # so edges sit on the 128-lane axis inside the kernel (lane-dense dots,
    # tanh/log, and reduce).  Data-dependent gather stays in the wrapper (XLA).
    fe = jnp.pad(f32, ((0, 0), (0, c_pad - n_comm))).astype(edge_dtype)   # (N, C_pad)
    src_idx = jnp.pad(edge_src.astype(jnp.int32), (0, e_pad - n_edges))
    dst_idx = jnp.pad(edge_dst.astype(jnp.int32), (0, e_pad - n_edges))
    fsrc = jnp.take(fe, src_idx, axis=0).T                   # (C_pad, E_pad)
    fdst = jnp.take(fe, dst_idx, axis=0).T                   # (C_pad, E_pad)

    edge_parts = pl.pallas_call(
        partial(_edge_block_kernel, n_edges=n_edges),
        grid=(n_edge_tiles,),
        in_specs=[pl.BlockSpec((c_pad, te), lambda i: (0, i)),
                  pl.BlockSpec((c_pad, te), lambda i: (0, i))],
        out_specs=pl.BlockSpec((1, 1, 128), lambda i: (i, 0, 0)),
        out_shape=jax.ShapeDtypeStruct((n_edge_tiles, 1, 128), jnp.float32),
        compiler_params=pltpu.CompilerParams(
            dimension_semantics=("parallel",),
            # Raise v5e (16 MiB) / v6e (32 MiB) scoped-VMEM defaults so the big
            # tiles fit; tile budgeting above keeps this < v7x's 64 MiB/TC.
            vmem_limit_bytes=48 * 1024 * 1024),
    )(fsrc, fdst)
    edge_total = jnp.sum(edge_parts[:, 0, 0])

    return edge_total - tri_total


def _reference(f: np.ndarray, edge_index: np.ndarray, n_nodes: int) -> float:
    """Plain numpy re-implementation of the PyTorch forward (for checking)."""
    edges = [tuple(e) for e in edge_index.T.tolist()]
    non_edges = [p for p in itertools.combinations(range(n_nodes), 2)
                 if p not in edges]
    e0 = np.array([e[0] for e in edges])
    e1 = np.array([e[1] for e in edges])
    n0 = np.array([p[0] for p in non_edges])
    n1 = np.array([p[1] for p in non_edges])
    edge_dots = np.einsum("ij,ij->i", f[e0], f[e1])
    non_edge_dots = np.einsum("ij,ij->i", f[n0], f[n1])
    return float(np.sum(np.log(1.0 - np.exp(-edge_dots))) - np.sum(non_edge_dots))


if __name__ == "__main__":
    n_nodes = 16
    n_comm = 8

    # Deterministic small graph: a ring over 16 nodes (edges given as i < j).
    ring = [(i, i + 1) for i in range(n_nodes - 1)] + [(0, n_nodes - 1)]
    edge_index = np.array(ring, dtype=np.int32).T             # (2, E)

    # Community membership table F — positive so the edge log-term is finite.
    key = jax.random.PRNGKey(0)
    f = jax.random.uniform(key, (n_nodes, n_comm), dtype=jnp.float32,
                           minval=0.1, maxval=1.0)

    loss_fn = jax.jit(graph_log_likelihood)
    loss = loss_fn(f, jnp.asarray(edge_index[0]), jnp.asarray(edge_index[1]))
    loss = jax.block_until_ready(loss)

    ref = _reference(np.asarray(f), edge_index, n_nodes)
    # Tolerance covers the bf16 rounding of the gathered edge operands.
    np.testing.assert_allclose(float(loss), ref, rtol=1e-3, atol=5e-2)

    print("KERNEL_OK")
</pallas_src>

<mosaic_0001>
module attributes {stable_mosaic.version = 11 : i64} {
  func.func @_edge_block_kernel(%arg0: i32, %arg1: memref<16x512xbf16, #tpu.memory_space<vmem>>, %arg2: memref<16x512xbf16, #tpu.memory_space<vmem>>, %arg3: memref<1x1x128xf32, #tpu.memory_space<vmem>>) attributes {dimension_semantics = [#tpu.dimension_semantics<parallel>], iteration_bounds = array<i64: 1>, scalar_prefetch = 0 : i64, scratch_operands = 0 : i64, tpu.core_type = #tpu.core_type<tc>, window_params = [{transform_indices = @transform_0, window_bounds = array<i64: 16, 512>}, {transform_indices = @transform_1, window_bounds = array<i64: 16, 512>}, {transform_indices = @transform_2, window_bounds = array<i64: 1, 1, 128>}]} {
    %c0 = arith.constant 0 : index
    %c0_0 = arith.constant 0 : index
    %0 = vector.load %arg1[%c0, %c0_0] : memref<16x512xbf16, #tpu.memory_space<vmem>>, vector<16x512xbf16>
    %1 = arith.extf %0 : vector<16x512xbf16> to vector<16x512xf32>
    %c0_1 = arith.constant 0 : index
    %c0_2 = arith.constant 0 : index
    %2 = vector.load %arg2[%c0_1, %c0_2] : memref<16x512xbf16, #tpu.memory_space<vmem>>, vector<16x512xbf16>
    %3 = arith.extf %2 : vector<16x512xbf16> to vector<16x512xf32>
    %4 = arith.mulf %1, %3 : vector<16x512xf32>
    %cst = arith.constant dense<0.000000e+00> : vector<512xf32>
    %5 = vector.multi_reduction <add>, %4, %cst [0] : vector<16x512xf32> to vector<512xf32>
    %6 = vector.shape_cast %5 : vector<512xf32> to vector<1x512xf32>
    %7 = tpu.iota {dimensions = array<i32: 1>} : vector<1x512xi32>
    %c512_i32 = arith.constant 512 : i32
    %8 = arith.muli %arg0, %c512_i32 : i32
    %9 = vector.broadcast %8 : i32 to vector<1x512xi32>
    %10 = arith.addi %9, %7 : vector<1x512xi32>
    %c16_i32 = arith.constant 16 : i32
    %11 = vector.broadcast %c16_i32 : i32 to vector<1x512xi32>
    %12 = arith.cmpi slt, %10, %11 : vector<1x512xi32>
    %cst_3 = arith.constant 1.000000e+00 : f32
    %13 = vector.broadcast %cst_3 : f32 to vector<1x512xf32>
    %14 = arith.select %12, %6, %13 : vector<1x512xi1>, vector<1x512xf32>
    %cst_4 = arith.constant 5.000000e-01 : f32
    %15 = vector.broadcast %cst_4 : f32 to vector<1x512xf32>
    %16 = arith.mulf %15, %14 : vector<1x512xf32>
    %17 = math.tanh %16 : vector<1x512xf32>
    %cst_5 = arith.constant 2.000000e+00 : f32
    %18 = vector.broadcast %cst_5 : f32 to vector<1x512xf32>
    %19 = arith.mulf %18, %17 : vector<1x512xf32>
    %cst_6 = arith.constant 1.000000e+00 : f32
    %20 = vector.broadcast %cst_6 : f32 to vector<1x512xf32>
    %21 = arith.addf %20, %17 : vector<1x512xf32>
    %22 = arith.divf %19, %21 : vector<1x512xf32>
    %23 = math.log %22 : vector<1x512xf32>
    %24 = arith.addf %14, %23 : vector<1x512xf32>
    %cst_7 = arith.constant 0.000000e+00 : f32
    %25 = vector.broadcast %cst_7 : f32 to vector<1x512xf32>
    %26 = arith.select %12, %24, %25 : vector<1x512xi1>, vector<1x512xf32>
    %cst_8 = arith.constant dense<0.000000e+00> : vector<1xf32>
    %27 = vector.multi_reduction <add>, %26, %cst_8 [1] : vector<1x512xf32> to vector<1xf32>
    %28 = vector.shape_cast %27 : vector<1xf32> to vector<1x1xf32>
    %29 = vector.shape_cast %28 : vector<1x1xf32> to vector<1x1x1xf32>
    %30 = vector.broadcast %29 : vector<1x1x1xf32> to vector<1x1x128xf32>
    %c0_9 = arith.constant 0 : index
    %c0_10 = arith.constant 0 : index
    %c0_11 = arith.constant 0 : index
    %31 = vector.load %arg3[%c0_9, %c0_10, %c0_11] : memref<1x1x128xf32, #tpu.memory_space<vmem>>, vector<1x1x128xf32>
    tpu.vector_store %arg3[%c0_9, %c0_10, %c0_11], %30 {strides = array<i32>} : memref<1x1x128xf32, #tpu.memory_space<vmem>>, vector<1x1x128xf32>,
    return
  }
  func.func @transform_0(%arg0: i32) -> (i32, i32) {
    %c0_i32 = arith.constant 0 : i32
    %c0_i32_0 = arith.constant 0 : i32
    return %c0_i32, %arg0 : i32, i32
  }
  func.func @transform_1(%arg0: i32) -> (i32, i32) {
    %c0_i32 = arith.constant 0 : i32
    %c0_i32_0 = arith.constant 0 : i32
    return %c0_i32, %arg0 : i32, i32
  }
  func.func @transform_2(%arg0: i32) -> (i32, i32, i32) {
    %c0_i32 = arith.constant 0 : i32
    %c0_i32_0 = arith.constant 0 : i32
    %c0_i32_1 = arith.constant 0 : i32
    return %arg0, %c0_i32, %c0_i32_0 : i32, i32, i32
  }
}

</mosaic_0001>

<llo_original>
// kernel: graph_log_likelihood.1
$region0: #{graph_log_likelihood.1}
  #allocation0 [shape = 'u32[]', space=smem, size = 0x4, offset = 0x4, fixed_abs, tag = 'smem constant byte address 0x4 - core index']
  #allocation1 [shape = 'u32[144,128]{1,0:T(1,128)}', space=vmem, size = 0x12000, scoped, tag = 'internal scratch']
  %s0 = inlined_call_operand.vmem [shape: bf16[16,512], index: 0, kind: input, shape index: {}]
  %s1 = inlined_call_operand.vmem [shape: bf16[16,512], index: 1, kind: input, shape index: {}]
  %s2 = inlined_call_operand.vmem [shape: f32[1,1,128], index: 2, kind: output, shape index: {}]
  %s3 = sld [smem:[#allocation0]]
  $region18: #{graph_log_likelihood.1} parent=0
    _
  %s5 = ssub.s32 1, %s3
  %s6 = scalar_select 0, %s5, %s3
  // Predicated region
  $region2: #{graph_log_likelihood.1} parent=0 // pred_check
    _
  $region3: #{graph_log_likelihood.1} parent=0 // pred_check_branch
    %8 = sbr.rel (0) target = $region5
  $region4: #{graph_log_likelihood.1} parent=0 // pred_region
    _
  $region5: #{graph_log_likelihood.1} parent=0 // pred_fallthru
    _
  // Predicated region
  $region6: #{graph_log_likelihood.1} parent=0 // pred_check
    _
  $region7: #{graph_log_likelihood.1} parent=0 // pred_check_branch
    %10 = sbr.rel (0) target = $region9
  $region8: #{graph_log_likelihood.1} parent=0 // pred_region
    _
  $region9: #{graph_log_likelihood.1} parent=0 // pred_fallthru
    _
  %v11 = vld [vmem:[%s0] sm:$0xff]
  %v12 = vld [vmem:[%s0 + $0x8] sm:$0xff]
  %v13 = vld [vmem:[%s0 + $0x10] sm:$0xff]
  %v14 = vld [vmem:[%s0 + $0x18] sm:$0xff]
  %v15 = vunpack.c.l.bf16 %v11
  %v16 = vunpack.c.h.bf16 %v11
  %v17 = vunpack.c.l.bf16 %v12
  %v18 = vunpack.c.h.bf16 %v12
  %v19 = vunpack.c.l.bf16 %v13
  %v20 = vunpack.c.h.bf16 %v13
  %v21 = vunpack.c.l.bf16 %v14
  %v22 = vunpack.c.h.bf16 %v14
  %v23 = vld [vmem:[%s1] sm:$0xff]
  %v24 = vld [vmem:[%s1 + $0x8] sm:$0xff]
  %v25 = vld [vmem:[%s1 + $0x10] sm:$0xff]
  %v26 = vld [vmem:[%s1 + $0x18] sm:$0xff]
  %v27 = vunpack.c.l.bf16 %v23
  %v28 = vunpack.c.h.bf16 %v23
  %v29 = vunpack.c.l.bf16 %v24
  %v30 = vunpack.c.h.bf16 %v24
  %v31 = vunpack.c.l.bf16 %v25
  %v32 = vunpack.c.h.bf16 %v25
  %v33 = vunpack.c.l.bf16 %v26
  %v34 = vunpack.c.h.bf16 %v26
  %v35 = vmul.f32 %v15, %v27
  %v36 = vmul.f32 %v16, %v28
  %v37 = vmul.f32 %v17, %v29
  %v38 = vmul.f32 %v18, %v30
  %v39 = vmul.f32 %v19, %v31
  %v40 = vmul.f32 %v20, %v32
  %v41 = vmul.f32 %v21, %v33
  %v42 = vmul.f32 %v22, %v34
  %v43 = vadd.f32 %v35, %v39
  %v44 = vrot.slane %v43, 4
  %v45 = vadd.f32 %v43, %v44
  %v46 = vrot.slane %v45, 2
  %v47 = vadd.f32 %v45, %v46
  %v48 = vrot.slane %v47, 1
  %v49 = vadd.f32 %v47, %v48
  %v50 = vadd.f32 %v36, %v40
  %v51 = vrot.slane %v50, 4
  %v52 = vadd.f32 %v50, %v51
  %v53 = vrot.slane %v52, 2
  %v54 = vadd.f32 %v52, %v53
  %v55 = vrot.slane %v54, 1
  %v56 = vadd.f32 %v54, %v55
  %v57 = vadd.f32 %v37, %v41
  %v58 = vrot.slane %v57, 4
  %v59 = vadd.f32 %v57, %v58
  %v60 = vrot.slane %v59, 2
  %v61 = vadd.f32 %v59, %v60
  %v62 = vrot.slane %v61, 1
  %v63 = vadd.f32 %v61, %v62
  %v64 = vadd.f32 %v38, %v42
  %v65 = vrot.slane %v64, 4
  %v66 = vadd.f32 %v64, %v65
  %v67 = vrot.slane %v66, 2
  %v68 = vadd.f32 %v66, %v67
  %v69 = vrot.slane %v68, 1
  %v70 = vadd.f32 %v68, %v69
  %v71 = vlaneseq
  %v72 = vand.u32 %v71, 127
  %v73 = vadd.s32 %v72, 128
  %v74 = vadd.s32 %v72, 256
  %v75 = vadd.s32 %v72, 384
  %s76 = smul.u32 0, 512
  %v77 = vstv %s76
  %v78 = vadd.s32 %v77, %v72
  %v79 = vadd.s32 %v77, %v73
  %v80 = vadd.s32 %v77, %v74
  %v81 = vadd.s32 %v77, %v75
  %vm82 = vcmp.lt.s32.totalorder %v78, 16
  %vm83 = vcmp.lt.s32.totalorder %v79, 16
  %vm84 = vcmp.lt.s32.totalorder %v80, 16
  %vm85 = vcmp.lt.s32.totalorder %v81, 16
  %v86 = vsel %vm82, %v49, 1.0
  %v87 = vsel %vm83, %v56, 1.0
  %v88 = vsel %vm84, %v63, 1.0
  %v89 = vsel %vm85, %v70, 1.0
  %v90 = vmul.f32 %v86, 0.5
  %v91 = vmul.f32 %v87, 0.5
  %v92 = vmul.f32 %v88, 0.5
  %v93 = vmul.f32 %v89, 0.5
  %v94 = vtanh.pop %v90
  %v95 = vtanh.pop %v91
  %v96 = vtanh.pop %v92
  %v97 = vtanh.pop %v93
  %v98 = vmul.f32 %v94, 2.0
  %v99 = vmul.f32 %v95, 2.0
  %v100 = vmul.f32 %v96, 2.0
  %v101 = vmul.f32 %v97, 2.0
  %v102 = vadd.f32 %v94, 1.0
  %v103 = vadd.f32 %v95, 1.0
  %v104 = vadd.f32 %v96, 1.0
  %v105 = vadd.f32 %v97, 1.0
  %v106 = vrcp.pop %v102
  %v107 = vmul.f32 %v98, %v106
  %v108 = vrcp.pop %v103
  %v109 = vmul.f32 %v99, %v108
  %v110 = vrcp.pop %v104
  %v111 = vmul.f32 %v100, %v110
  %v112 = vrcp.pop %v105
  %v113 = vmul.f32 %v101, %v112
  %v114 = vlog2.pop %v107
  %v115 = vmul.f32 %v114, 0.6931472
  %v116 = vlog2.pop %v109
  %v117 = vmul.f32 %v116, 0.6931472
  %v118 = vlog2.pop %v111
  %v119 = vmul.f32 %v118, 0.6931472
  %v120 = vlog2.pop %v113
  %v121 = vmul.f32 %v120, 0.6931472
  %v122 = vadd.f32 %v86, %v115
  %v123 = vadd.f32 %v87, %v117
  %v124 = vadd.f32 %v88, %v119
  %v125 = vadd.f32 %v89, %v121
  %v126 = vsel %vm82, %v122, 0.0
  %v127 = vsel %vm83, %v123, 0.0
  %v128 = vsel %vm84, %v124, 0.0
  %v129 = vsel %vm85, %v125, 0.0
  %v130 = vadd.f32 %v126, %v127
  %v131 = vadd.f32 %v130, %v128
  %v132 = vadd.f32 %v131, %v129
  %133 = vadd.xlane.f32.xlu0 %v132
  %v134 = vpop.xlane.xlu0 %133
  %135 = vst [vmem:[%s2] sm:$0x1] %v134
  // Predicated region
  $region10: #{graph_log_likelihood.1} parent=0 // pred_check
    _
  $region11: #{graph_log_likelihood.1} parent=0 // pred_check_branch
    %137 = sbr.rel (0) target = $region13
  $region12: #{graph_log_likelihood.1} parent=0 // pred_region
    _
  $region13: #{graph_log_likelihood.1} parent=0 // pred_fallthru
    _
  // Predicated region
  $region14: #{graph_log_likelihood.1} parent=0 // pred_check
    _
  $region15: #{graph_log_likelihood.1} parent=0 // pred_check_branch
    %139 = sbr.rel (0) target = $region17
  $region16: #{graph_log_likelihood.1} parent=0 // pred_region
    _
  $region17: #{graph_log_likelihood.1} parent=0 // pred_fallthru
    _

</llo_original>
